<compile_context>
chip_gen: v6e
topology: v6e:2x2x1
jax: 0.10.0
libtpu: 0.0.40
codegen_flags: <defaults>
</compile_context>

<pallas_src>
import jax
import jax.numpy as jnp
from jax import lax
from jax.experimental import pallas as pl
from jax.experimental.pallas import tpu as pltpu

IN_F = 512          # fc1 in/out features
OUT_F = 128         # final embedding size
ROW_ALIGN = 16      # bf16 min M tile (16, 128) -> keep row tiles 16-aligned
BN_EPS = 1e-5
L2_EPS = 1e-12      # torch.nn.functional.normalize eps


def _cdiv(a, b):
    return -(-a // b)


def _round_up(n, m):
    return _cdiv(n, m) * m


def _tpu_defaults():
    """Generation-gated tuning constants, with safe fallbacks."""
    kind = ""
    try:
        kind = jax.devices()[0].device_kind.lower()
    except Exception:
        pass
    if "v5" in kind:
        tb_max = 512        # v5e: 512-row step already MXU-bound; bigger tiles only
                            # shave per-step overhead.
    else:
        tb_max = 1024       # v6e/v7x (and unknown): HBM-DMA bound -> larger tiles.
    num_tc = 2 if "v7" in kind else 1   # v7x: 2 TensorCores per chip
    return tb_max, num_tc


TB_MAX, NUM_TC = _tpu_defaults()


def _mlp_kernel(x_ref, w1_ref, b1_ref, w2_ref, b2_ref, o_ref):
    # fc1 with folded bn1 + relu.  bf16 operands, f32 MXU accumulation.
    h = jnp.dot(x_ref[...], w1_ref[...], preferred_element_type=jnp.float32)
    h = jnp.maximum(h + b1_ref[...], 0.0)
    # fc2 (no bias) with folded bn2.
    z = jnp.dot(h.astype(jnp.bfloat16), w2_ref[...],
                preferred_element_type=jnp.float32)
    z = z + b2_ref[...]
    # L2 normalize per row (F.normalize p=2 dim=1): clamping the squared norm
    # at eps^2 is equivalent to clamping the norm at eps; single rsqrt (EUP).
    sq = jnp.sum(z * z, axis=-1, keepdims=True)
    inv = lax.rsqrt(jnp.maximum(sq, L2_EPS * L2_EPS))
    o_ref[...] = z * inv


def _choose_tiling(n):
    """Pick (row_tile, padded_rows) for n input rows.

    * 16-aligned tiles (bf16 sublane packing).
    * Balanced tiles: avoids the ~2x padding cliff just past TB_MAX.
    * On v7x, force >=2 grid steps once each core can get >=64 rows so the
      "parallel" grid axis actually uses both TensorCores.
    """
    n16 = _round_up(max(n, 1), ROW_ALIGN)
    steps = _cdiv(n16, TB_MAX)
    if NUM_TC > 1 and steps < NUM_TC and n16 >= 64 * NUM_TC:
        steps = NUM_TC
    tb = _round_up(_cdiv(n16, steps), ROW_ALIGN)
    n_pad = tb * steps
    return tb, n_pad


@jax.jit
def _run_mlp_rows(rows, w1_f, b1_f, w2_f, b2_f):
    """rows: (N, 512) f32 -> (N, 128) f32 (L2-normalized embeddings)."""
    n = rows.shape[0]
    tb, n_pad = _choose_tiling(n)
    rows_p = jnp.pad(rows, ((0, n_pad - n), (0, 0))).astype(jnp.bfloat16)
    grid = (n_pad // tb,)

    out = pl.pallas_call(
        _mlp_kernel,
        out_shape=jax.ShapeDtypeStruct((n_pad, OUT_F), jnp.float32),
        grid_spec=pltpu.PrefetchScalarGridSpec(
            num_scalar_prefetch=0,
            grid=grid,
            in_specs=[
                pl.BlockSpec((tb, IN_F), lambda i: (i, 0)),      # x rows (bf16)
                pl.BlockSpec((IN_F, IN_F), lambda i: (0, 0)),    # folded W1^T (bf16)
                pl.BlockSpec((1, IN_F), lambda i: (0, 0)),       # folded bias1 (f32)
                pl.BlockSpec((IN_F, OUT_F), lambda i: (0, 0)),   # folded W2^T (bf16)
                pl.BlockSpec((1, OUT_F), lambda i: (0, 0)),      # folded bias2 (f32)
            ],
            out_specs=pl.BlockSpec((tb, OUT_F), lambda i: (i, 0)),
        ),
        compiler_params=pltpu.CompilerParams(
            dimension_semantics=("parallel",)),
    )(rows_p, w1_f, b1_f, w2_f, b2_f)
    return out[:n]


def _ref_rows(rows, w1_f, b1_f, w2_f, b2_f):
    """Pure-JAX reference mirroring the kernel math (bf16 operands, f32 acc)."""
    x = rows.astype(jnp.bfloat16)
    h = jnp.dot(x, w1_f, preferred_element_type=jnp.float32) + b1_f
    h = jnp.maximum(h, 0.0)
    z = jnp.dot(h.astype(jnp.bfloat16), w2_f,
                preferred_element_type=jnp.float32) + b2_f
    sq = jnp.sum(z * z, axis=-1, keepdims=True)
    return z * lax.rsqrt(jnp.maximum(sq, L2_EPS * L2_EPS))


def init_params(key):
    """Deterministic parameter init matching the module's shapes, with
    eval-mode BatchNorm folded into the linear weights/biases."""
    ks = jax.random.split(key, 6)
    bound = 1.0 / jnp.sqrt(jnp.float32(IN_F))
    # fc1: Linear(512, 512, bias=True)
    w1 = jax.random.uniform(ks[0], (IN_F, IN_F), jnp.float32, -bound, bound)
    b1 = jax.random.uniform(ks[1], (IN_F,), jnp.float32, -bound, bound)
    # fc2: Linear(512, 128, bias=False)
    w2 = jax.random.uniform(ks[2], (OUT_F, IN_F), jnp.float32, -bound, bound)
    # BatchNorm1d(512) / BatchNorm1d(128): eval-mode params
    g1 = 1.0 + 0.1 * jax.random.normal(ks[3], (IN_F,), jnp.float32)
    be1 = 0.1 * jax.random.normal(ks[4], (IN_F,), jnp.float32)
    g2 = 1.0 + 0.1 * jax.random.normal(ks[5], (OUT_F,), jnp.float32)
    be2 = jnp.zeros((OUT_F,), jnp.float32)
    rm1 = jnp.zeros((IN_F,), jnp.float32)
    rv1 = jnp.ones((IN_F,), jnp.float32)
    rm2 = jnp.zeros((OUT_F,), jnp.float32)
    rv2 = jnp.ones((OUT_F,), jnp.float32)

    # BN affine: y = z*scale + shift, scale = g/sqrt(var+eps),
    # shift = beta - mean*scale.
    s1 = g1 / jnp.sqrt(rv1 + BN_EPS)
    t1 = be1 - rm1 * s1
    s2 = g2 / jnp.sqrt(rv2 + BN_EPS)
    t2 = be2 - rm2 * s2

    # Fold BN into the linears (exact for eval-mode BN):
    #   (x @ W1^T + b1)*s1 + t1  ==  x @ (W1^T * s1) + (b1*s1 + t1)
    #   (h @ W2^T)*s2 + t2       ==  h @ (W2^T * s2) + t2
    w1_f = (w1.T * s1[None, :]).astype(jnp.bfloat16)      # (512, 512)
    b1_f = (b1 * s1 + t1).reshape(1, IN_F)                 # (1, 512) f32
    w2_f = (w2.T * s2[None, :]).astype(jnp.bfloat16)       # (512, 128)
    b2_f = t2.reshape(1, OUT_F)                            # (1, 128) f32

    return {"w1_f": w1_f, "b1_f": b1_f, "w2_f": w2_f, "b2_f": b2_f}


def mlp_forward(x, clip_type, params):
    """x: (B, C, T, H, W) with C*H*W == 512 (NCTHW, as in PyTorch)."""
    p = params
    args = (p["w1_f"], p["b1_f"], p["w2_f"], p["b2_f"])

    if clip_type == "d":
        # AdaptiveAvgPool3d((1, None, None)) -> mean over temporal dim, flatten(1)
        # TODO(synk): at large batch, fuse the temporal mean into the kernel to
        #             save one HBM round-trip of the (N,512) rows; not worth it
        #             at the 8-40 row workloads this serves.
        rows = jnp.mean(x, axis=2).reshape(x.shape[0], -1)          # (B, 512)
        return _run_mlp_rows(rows, *args)
    elif clip_type == "s":
        b = x.shape[0]
        gsr_rows = jnp.mean(x, axis=2).reshape(b, -1)               # (B, 512)
        slice_rows = [x[:, :, i, :, :].reshape(b, -1) for i in range(4)]
        all_rows = jnp.concatenate([gsr_rows] + slice_rows, axis=0)  # (5B, 512)
        out = _run_mlp_rows(all_rows, *args)                        # ONE kernel call
        gsr, x1, x2, x3, x4 = (out[i * b:(i + 1) * b] for i in range(5))
        return (gsr, x1, x2, x3, x4)
    else:
        return (None, None, None, None, None)


if __name__ == "__main__":
    key = jax.random.PRNGKey(0)
    kp, kx, kb = jax.random.split(key, 3)
    params = init_params(kp)
    args = (params["w1_f"], params["b1_f"], params["w2_f"], params["b2_f"])

    # Small video-like input: (B, C, T, H, W) with C*H*W = 128*2*2 = 512
    B, C, T, H, W = 8, 128, 4, 2, 2
    x = jax.random.normal(kx, (B, C, T, H, W), jnp.float32)

    # 'd' path (single grid step, 16-row-aligned tile)
    emb_d = mlp_forward(x, "d", params)
    emb_d = jax.block_until_ready(emb_d)
    assert emb_d.shape == (B, OUT_F)

    # Compare against a pure-JAX reference using the same bf16/f32 math.
    rows_d = jnp.mean(x, axis=2).reshape(B, -1)
    ref_d = jax.block_until_ready(_ref_rows(rows_d, *args))
    assert bool(jnp.max(jnp.abs(emb_d - ref_d)) < 2e-3)

    # 's' path: all 5 sub-batches go through one kernel call (40 rows).
    gsr, x1, x2, x3, x4 = mlp_forward(x, "s", params)
    jax.block_until_ready((gsr, x1, x2, x3, x4))
    assert gsr.shape == (B, OUT_F) and x4.shape == (B, OUT_F)

    # Rows are L2-normalized (normalization is exact in f32).
    norms = jnp.linalg.norm(emb_d, axis=1)
    assert bool(jnp.all(jnp.abs(norms - 1.0) < 1e-4))
    norms_s = jnp.linalg.norm(x3, axis=1)
    assert bool(jnp.all(jnp.abs(norms_s - 1.0) < 1e-4))

    # Exercise the multi-step / balanced-tile path (also the v7x 2-core split):
    # TB_MAX + 40 rows forces >=2 grid steps on every generation.
    n_big = TB_MAX + 40
    rows_big = jax.random.normal(kb, (n_big, IN_F), jnp.float32)
    out_big = jax.block_until_ready(_run_mlp_rows(rows_big, *args))
    ref_big = jax.block_until_ready(_ref_rows(rows_big, *args))
    assert out_big.shape == (n_big, OUT_F)
    assert bool(jnp.max(jnp.abs(out_big - ref_big)) < 2e-3)
    norms_big = jnp.linalg.norm(out_big, axis=1)
    assert bool(jnp.all(jnp.abs(norms_big - 1.0) < 1e-4))

    print("KERNEL_OK")
</pallas_src>

<mosaic_0001>
module attributes {stable_mosaic.version = 11 : i64} {
  func.func @_mlp_kernel(%arg0: i32, %arg1: memref<16x512xbf16, #tpu.memory_space<vmem>>, %arg2: memref<512x512xbf16, #tpu.memory_space<vmem>>, %arg3: memref<1x512xf32, #tpu.memory_space<vmem>>, %arg4: memref<512x128xbf16, #tpu.memory_space<vmem>>, %arg5: memref<1x128xf32, #tpu.memory_space<vmem>>, %arg6: memref<16x128xf32, #tpu.memory_space<vmem>>) attributes {dimension_semantics = [#tpu.dimension_semantics<parallel>], iteration_bounds = array<i64: 1>, scalar_prefetch = 0 : i64, scratch_operands = 0 : i64, tpu.core_type = #tpu.core_type<tc>, window_params = [{transform_indices = @transform_0, window_bounds = array<i64: 16, 512>}, {pipeline_mode = #tpu.pipeline_mode<synchronous>, transform_indices = @transform_1, window_bounds = array<i64: 512, 512>}, {pipeline_mode = #tpu.pipeline_mode<synchronous>, transform_indices = @transform_2, window_bounds = array<i64: 1, 512>}, {pipeline_mode = #tpu.pipeline_mode<synchronous>, transform_indices = @transform_3, window_bounds = array<i64: 512, 128>}, {pipeline_mode = #tpu.pipeline_mode<synchronous>, transform_indices = @transform_4, window_bounds = array<i64: 1, 128>}, {transform_indices = @transform_5, window_bounds = array<i64: 16, 128>}]} {
    %c0 = arith.constant 0 : index
    %c0_0 = arith.constant 0 : index
    %0 = vector.load %arg1[%c0, %c0_0] : memref<16x512xbf16, #tpu.memory_space<vmem>>, vector<16x512xbf16>
    %c0_1 = arith.constant 0 : index
    %c0_2 = arith.constant 0 : index
    %1 = vector.load %arg2[%c0_1, %c0_2] : memref<512x512xbf16, #tpu.memory_space<vmem>>, vector<512x512xbf16>
    %cst = arith.constant dense<0.000000e+00> : vector<16x512xf32>
    %2 = tpu.matmul %0, %1, %cst {dimension_numbers = #tpu.dot_dimension_numbers<[1], [0], [0], [1], [0, 0, 1, 1], [], []>} : vector<16x512xbf16>, vector<512x512xbf16>, vector<16x512xf32> -> vector<16x512xf32>
    %c0_3 = arith.constant 0 : index
    %c0_4 = arith.constant 0 : index
    %3 = vector.load %arg3[%c0_3, %c0_4] : memref<1x512xf32, #tpu.memory_space<vmem>>, vector<1x512xf32>
    %4 = vector.broadcast %3 : vector<1x512xf32> to vector<16x512xf32>
    %5 = arith.addf %2, %4 : vector<16x512xf32>
    %cst_5 = arith.constant 0.000000e+00 : f32
    %6 = vector.broadcast %cst_5 : f32 to vector<16x512xf32>
    %7 = arith.maximumf %5, %6 : vector<16x512xf32>
    %8 = arith.truncf %7 : vector<16x512xf32> to vector<16x512xbf16>
    %c0_6 = arith.constant 0 : index
    %c0_7 = arith.constant 0 : index
    %9 = vector.load %arg4[%c0_6, %c0_7] : memref<512x128xbf16, #tpu.memory_space<vmem>>, vector<512x128xbf16>
    %cst_8 = arith.constant dense<0.000000e+00> : vector<16x128xf32>
    %10 = tpu.matmul %8, %9, %cst_8 {dimension_numbers = #tpu.dot_dimension_numbers<[1], [0], [0], [1], [0, 0, 1, 1], [], []>} : vector<16x512xbf16>, vector<512x128xbf16>, vector<16x128xf32> -> vector<16x128xf32>
    %c0_9 = arith.constant 0 : index
    %c0_10 = arith.constant 0 : index
    %11 = vector.load %arg5[%c0_9, %c0_10] : memref<1x128xf32, #tpu.memory_space<vmem>>, vector<1x128xf32>
    %12 = vector.broadcast %11 : vector<1x128xf32> to vector<16x128xf32>
    %13 = arith.addf %10, %12 : vector<16x128xf32>
    %14 = arith.mulf %13, %13 : vector<16x128xf32>
    %cst_11 = arith.constant dense<0.000000e+00> : vector<16xf32>
    %15 = vector.multi_reduction <add>, %14, %cst_11 [1] : vector<16x128xf32> to vector<16xf32>
    %16 = vector.shape_cast %15 : vector<16xf32> to vector<16x1xf32>
    %cst_12 = arith.constant 1.000000e-24 : f32
    %17 = vector.broadcast %cst_12 : f32 to vector<16x1xf32>
    %18 = arith.maximumf %16, %17 : vector<16x1xf32>
    %19 = math.rsqrt %18 : vector<16x1xf32>
    %20 = vector.broadcast %19 : vector<16x1xf32> to vector<16x128xf32>
    %21 = arith.mulf %13, %20 : vector<16x128xf32>
    %c0_13 = arith.constant 0 : index
    %c0_14 = arith.constant 0 : index
    %22 = vector.load %arg6[%c0_13, %c0_14] : memref<16x128xf32, #tpu.memory_space<vmem>>, vector<16x128xf32>
    tpu.vector_store %arg6[%c0_13, %c0_14], %21 {strides = array<i32>} : memref<16x128xf32, #tpu.memory_space<vmem>>, vector<16x128xf32>,
    return
  }
  func.func @transform_0(%arg0: i32) -> (i32, i32) {
    %c0_i32 = arith.constant 0 : i32
    %c0_i32_0 = arith.constant 0 : i32
    return %arg0, %c0_i32 : i32, i32
  }
  func.func @transform_1(%arg0: i32) -> (i32, i32) {
    %c0_i32 = arith.constant 0 : i32
    %c0_i32_0 = arith.constant 0 : i32
    %c0_i32_1 = arith.constant 0 : i32
    return %c0_i32, %c0_i32_0 : i32, i32
  }
  func.func @transform_2(%arg0: i32) -> (i32, i32) {
    %c0_i32 = arith.constant 0 : i32
    %c0_i32_0 = arith.constant 0 : i32
    %c0_i32_1 = arith.constant 0 : i32
    return %c0_i32, %c0_i32_0 : i32, i32
  }
  func.func @transform_3(%arg0: i32) -> (i32, i32) {
    %c0_i32 = arith.constant 0 : i32
    %c0_i32_0 = arith.constant 0 : i32
    %c0_i32_1 = arith.constant 0 : i32
    return %c0_i32, %c0_i32_0 : i32, i32
  }
  func.func @transform_4(%arg0: i32) -> (i32, i32) {
    %c0_i32 = arith.constant 0 : i32
    %c0_i32_0 = arith.constant 0 : i32
    %c0_i32_1 = arith.constant 0 : i32
    return %c0_i32, %c0_i32_0 : i32, i32
  }
  func.func @transform_5(%arg0: i32) -> (i32, i32) {
    %c0_i32 = arith.constant 0 : i32
    %c0_i32_0 = arith.constant 0 : i32
    return %arg0, %c0_i32 : i32, i32
  }
}

</mosaic_0001>

<llo_original>
// kernel: _run_mlp_rows.1
$region0: #{_run_mlp_rows.1}
  #allocation0 [shape = 'u32[]', space=smem, size = 0x4, offset = 0x4, fixed_abs, tag = 'smem constant byte address 0x4 - core index']
  #allocation1 [shape = 'u32[144,128]{1,0:T(1,128)}', space=vmem, size = 0x12000, scoped, tag = 'internal scratch']
  %s0 = inlined_call_operand.vmem [shape: bf16[16,512], index: 0, kind: input, shape index: {}]
  %s1 = inlined_call_operand.hbm [shape: bf16[512,512], index: 1, kind: input, shape index: {}]
  %s2 = inlined_call_operand.vmem [shape: f32[1,512], index: 2, kind: input, shape index: {}]
  %s3 = inlined_call_operand.hbm [shape: bf16[512,128], index: 3, kind: input, shape index: {}]
  %s4 = inlined_call_operand.vmem [shape: f32[1,128], index: 4, kind: input, shape index: {}]
  %s5 = inlined_call_operand.vmem [shape: f32[16,128], index: 5, kind: output, shape index: {}]
  %s6 = sld [smem:[#allocation0]]
  $region38: #{_run_mlp_rows.1} parent=0
    _
  %s8 = ssub.s32 1, %s6
  %s9 = scalar_select 0, %s8, %s6
  $region1: #{_run_mlp_rows.1} parent=0
    #allocation2 [shape = 'u8[524288]{0}', space=vmem, size = 0x80000, scoped, tag = 'input window, operand 1, single buffered']
    #allocation3 [shape = 's32[1]{0}', space=sflag, size = 0x4, scoped, tag = 'scoped memory for _run_mlp_rows.1']
    #allocation4 [shape = 'u8[131072]{0}', space=vmem, size = 0x20000, scoped, tag = 'input window, operand 3, single buffered']
    #allocation5 [shape = 's32[1]{0}', space=sflag, size = 0x4, scoped, tag = 'scoped memory for _run_mlp_rows.1']
    %10 = vsyncpa [#allocation3], 0
    %11 = vsyncpa [#allocation5], 0
    // Predicated region
    $region2: #{_run_mlp_rows.1} parent=1 // pred_check
      _
    $region3: #{_run_mlp_rows.1} parent=1 // pred_check_branch
      %13 = sbr.rel (0) target = $region5
    $region4: #{_run_mlp_rows.1} parent=1 // pred_region
      _
    $region5: #{_run_mlp_rows.1} parent=1 // pred_fallthru
      _
    // Predicated region
    $region6: #{_run_mlp_rows.1} parent=1 // pred_check
      _
    $region7: #{_run_mlp_rows.1} parent=1 // pred_check_branch
      %15 = sbr.rel (0) target = $region9
    $region8: #{_run_mlp_rows.1} parent=1 // pred_region
      %s17 = ssub.s32 16384, 16384
      %18 = vsyncadd [#allocation3], %s17
      %s19 = sshll.u32 [#allocation2], 4
      %s20 = int_to_ptr.vmem [resolvable:$true] %s19
      %25 = dma.hbm_to_vmem [thread:$0]  %s1, 16384, %s20, [#allocation3], 256, 256, 16
    $region9: #{_run_mlp_rows.1} parent=1 // pred_fallthru
      _
    // Predicated region
    $region10: #{_run_mlp_rows.1} parent=1 // pred_check
      _
    $region11: #{_run_mlp_rows.1} parent=1 // pred_check_branch
      %27 = sbr.rel (0) target = $region13
    $region12: #{_run_mlp_rows.1} parent=1 // pred_region
      _
    $region13: #{_run_mlp_rows.1} parent=1 // pred_fallthru
      _
    // Predicated region
    $region14: #{_run_mlp_rows.1} parent=1 // pred_check
      _
    $region15: #{_run_mlp_rows.1} parent=1 // pred_check_branch
      %29 = sbr.rel (0) target = $region17
    $region16: #{_run_mlp_rows.1} parent=1 // pred_region
      %s31 = ssub.s32 4096, 4096
      %32 = vsyncadd [#allocation5], %s31
      %s33 = sshll.u32 [#allocation4], 4
      %s34 = int_to_ptr.vmem [resolvable:$true] %s33
      %39 = dma.hbm_to_vmem [thread:$0]  %s3, 4096, %s34, [#allocation5], 64, 64, 4
    $region17: #{_run_mlp_rows.1} parent=1 // pred_fallthru
      _
    // Predicated region
    $region18: #{_run_mlp_rows.1} parent=1 // pred_check
      _
    $region19: #{_run_mlp_rows.1} parent=1 // pred_check_branch
      %41 = sbr.rel (0) target = $region21
    $region20: #{_run_mlp_rows.1} parent=1 // pred_region
      _
    $region21: #{_run_mlp_rows.1} parent=1 // pred_fallthru
      _
    // Predicated region
    $region22: #{_run_mlp_rows.1} parent=1 // pred_check
      _
    $region23: #{_run_mlp_rows.1} parent=1 // pred_check_branch
      %43 = sbr.rel (0) target = $region25
    $region24: #{_run_mlp_rows.1} parent=1 // pred_region
      %44 = dma.done [#allocation3], 16384
    $region25: #{_run_mlp_rows.1} parent=1 // pred_fallthru
      _
    // Predicated region
    $region26: #{_run_mlp_rows.1} parent=1 // pred_check
      _
    $region27: #{_run_mlp_rows.1} parent=1 // pred_check_branch
      %46 = sbr.rel (0) target = $region29
    $region28: #{_run_mlp_rows.1} parent=1 // pred_region
      %47 = dma.done [#allocation5], 4096
    $region29: #{_run_mlp_rows.1} parent=1 // pred_fallthru
      _
    %v49 = vld [vmem:[%s0] sm:$0xff]
    %v50 = vld [vmem:[%s0 + $0x8] sm:$0xff]
    %v51 = vld [vmem:[%s0 + $0x10] sm:$0xff]
    %v52 = vld [vmem:[%s0 + $0x18] sm:$0xff]
    %v53 = vld [vmem:[#allocation2] sm:$0xff]
    %v54 = vld [vmem:[#allocation2 + $0x8] sm:$0xff]
    %v55 = vld [vmem:[#allocation2 + $0x10] sm:$0xff]
    %v56 = vld [vmem:[#allocation2 + $0x18] sm:$0xff]
    %v57 = vld [vmem:[#allocation2 + $0x20] sm:$0xff]
    %v58 = vld [vmem:[#allocation2 + $0x28] sm:$0xff]
    %v59 = vld [vmem:[#allocation2 + $0x30] sm:$0xff]
    %v60 = vld [vmem:[#allocation2 + $0x38] sm:$0xff]
    %v61 = vld [vmem:[#allocation2 + $0x40] sm:$0xff]
    %v62 = vld [vmem:[#allocation2 + $0x48] sm:$0xff]
    %v63 = vld [vmem:[#allocation2 + $0x50] sm:$0xff]
    %v64 = vld [vmem:[#allocation2 + $0x58] sm:$0xff]
    %v65 = vld [vmem:[#allocation2 + $0x60] sm:$0xff]
    %v66 = vld [vmem:[#allocation2 + $0x68] sm:$0xff]
    %v67 = vld [vmem:[#allocation2 + $0x70] sm:$0xff]
    %v68 = vld [vmem:[#allocation2 + $0x78] sm:$0xff]
    %v69 = vld [vmem:[#allocation2 + $0x80] sm:$0xff]
    %v70 = vld [vmem:[#allocation2 + $0x88] sm:$0xff]
    %v71 = vld [vmem:[#allocation2 + $0x90] sm:$0xff]
    %v72 = vld [vmem:[#allocation2 + $0x98] sm:$0xff]
    %v73 = vld [vmem:[#allocation2 + $0xa0] sm:$0xff]
    %v74 = vld [vmem:[#allocation2 + $0xa8] sm:$0xff]
    %v75 = vld [vmem:[#allocation2 + $0xb0] sm:$0xff]
    %v76 = vld [vmem:[#allocation2 + $0xb8] sm:$0xff]
    %v77 = vld [vmem:[#allocation2 + $0xc0] sm:$0xff]
    %v78 = vld [vmem:[#allocation2 + $0xc8] sm:$0xff]
    %v79 = vld [vmem:[#allocation2 + $0xd0] sm:$0xff]
    %v80 = vld [vmem:[#allocation2 + $0xd8] sm:$0xff]
    %v81 = vld [vmem:[#allocation2 + $0xe0] sm:$0xff]
    %v82 = vld [vmem:[#allocation2 + $0xe8] sm:$0xff]
    %v83 = vld [vmem:[#allocation2 + $0xf0] sm:$0xff]
    %v84 = vld [vmem:[#allocation2 + $0xf8] sm:$0xff]
    %v85 = vld [vmem:[#allocation2 + $0x100] sm:$0xff]
    %v86 = vld [vmem:[#allocation2 + $0x108] sm:$0xff]
    %v87 = vld [vmem:[#allocation2 + $0x110] sm:$0xff]
    %v88 = vld [vmem:[#allocation2 + $0x118] sm:$0xff]
    %v89 = vld [vmem:[#allocation2 + $0x120] sm:$0xff]
    %v90 = vld [vmem:[#allocation2 + $0x128] sm:$0xff]
    %v91 = vld [vmem:[#allocation2 + $0x130] sm:$0xff]
    %v92 = vld [vmem:[#allocation2 + $0x138] sm:$0xff]
    %v93 = vld [vmem:[#allocation2 + $0x140] sm:$0xff]
    %v94 = vld [vmem:[#allocation2 + $0x148] sm:$0xff]
    %v95 = vld [vmem:[#allocation2 + $0x150] sm:$0xff]
    %v96 = vld [vmem:[#allocation2 + $0x158] sm:$0xff]
    %v97 = vld [vmem:[#allocation2 + $0x160] sm:$0xff]
    %v98 = vld [vmem:[#allocation2 + $0x168] sm:$0xff]
    %v99 = vld [vmem:[#allocation2 + $0x170] sm:$0xff]
    %v100 = vld [vmem:[#allocation2 + $0x178] sm:$0xff]
    %v101 = vld [vmem:[#allocation2 + $0x180] sm:$0xff]
    %v102 = vld [vmem:[#allocation2 + $0x188] sm:$0xff]
    %v103 = vld [vmem:[#allocation2 + $0x190] sm:$0xff]
    %v104 = vld [vmem:[#allocation2 + $0x198] sm:$0xff]
    %v105 = vld [vmem:[#allocation2 + $0x1a0] sm:$0xff]
    %v106 = vld [vmem:[#allocation2 + $0x1a8] sm:$0xff]
    %v107 = vld [vmem:[#allocation2 + $0x1b0] sm:$0xff]
    %v108 = vld [vmem:[#allocation2 + $0x1b8] sm:$0xff]
    %v109 = vld [vmem:[#allocation2 + $0x1c0] sm:$0xff]
    %v110 = vld [vmem:[#allocation2 + $0x1c8] sm:$0xff]
    %v111 = vld [vmem:[#allocation2 + $0x1d0] sm:$0xff]
    %v112 = vld [vmem:[#allocation2 + $0x1d8] sm:$0xff]
    %v113 = vld [vmem:[#allocation2 + $0x1e0] sm:$0xff]
    %v114 = vld [vmem:[#allocation2 + $0x1e8] sm:$0xff]
    %v115 = vld [vmem:[#allocation2 + $0x1f0] sm:$0xff]
    %v116 = vld [vmem:[#allocation2 + $0x1f8] sm:$0xff]
    %v117 = vld [vmem:[#allocation2 + $0x200] sm:$0xff]
    %v118 = vld [vmem:[#allocation2 + $0x208] sm:$0xff]
    %v119 = vld [vmem:[#allocation2 + $0x210] sm:$0xff]
    %v120 = vld [vmem:[#allocation2 + $0x218] sm:$0xff]
    %v121 = vld [vmem:[#allocation2 + $0x220] sm:$0xff]
    %v122 = vld [vmem:[#allocation2 + $0x228] sm:$0xff]
    %v123 = vld [vmem:[#allocation2 + $0x230] sm:$0xff]
    %v124 = vld [vmem:[#allocation2 + $0x238] sm:$0xff]
    %v125 = vld [vmem:[#allocation2 + $0x240] sm:$0xff]
    %v126 = vld [vmem:[#allocation2 + $0x248] sm:$0xff]
    %v127 = vld [vmem:[#allocation2 + $0x250] sm:$0xff]
    %v128 = vld [vmem:[#allocation2 + $0x258] sm:$0xff]
    %v129 = vld [vmem:[#allocation2 + $0x260] sm:$0xff]
    %v130 = vld [vmem:[#allocation2 + $0x268] sm:$0xff]
    %v131 = vld [vmem:[#allocation2 + $0x270] sm:$0xff]
    %v132 = vld [vmem:[#allocation2 + $0x278] sm:$0xff]
    %v133 = vld [vmem:[#allocation2 + $0x280] sm:$0xff]
    %v134 = vld [vmem:[#allocation2 + $0x288] sm:$0xff]
    %v135 = vld [vmem:[#allocation2 + $0x290] sm:$0xff]
    %v136 = vld [vmem:[#allocation2 + $0x298] sm:$0xff]
    %v137 = vld [vmem:[#allocation2 + $0x2a0] sm:$0xff]
    %v138 = vld [vmem:[#allocation2 + $0x2a8] sm:$0xff]
    %v139 = vld [vmem:[#allocation2 + $0x2b0] sm:$0xff]
    %v140 = vld [vmem:[#allocation2 + $0x2b8] sm:$0xff]
    %v141 = vld [vmem:[#allocation2 + $0x2c0] sm:$0xff]
    %v142 = vld [vmem:[#allocation2 + $0x2c8] sm:$0xff]
    %v143 = vld [vmem:[#allocation2 + $0x2d0] sm:$0xff]
    %v144 = vld [vmem:[#allocation2 + $0x2d8] sm:$0xff]
    %v145 = vld [vmem:[#allocation2 + $0x2e0] sm:$0xff]
    %v146 = vld [vmem:[#allocation2 + $0x2e8] sm:$0xff]
    %v147 = vld [vmem:[#allocation2 + $0x2f0] sm:$0xff]
    %v148 = vld [vmem:[#allocation2 + $0x2f8] sm:$0xff]
    %v149 = vld [vmem:[#allocation2 + $0x300] sm:$0xff]
    %v150 = vld [vmem:[#allocation2 + $0x308] sm:$0xff]
    %v151 = vld [vmem:[#allocation2 + $0x310] sm:$0xff]
    %v152 = vld [vmem:[#allocation2 + $0x318] sm:$0xff]
    %v153 = vld [vmem:[#allocation2 + $0x320] sm:$0xff]
    %v154 = vld [vmem:[#allocation2 + $0x328] sm:$0xff]
    %v155 = vld [vmem:[#allocation2 + $0x330] sm:$0xff]
    %v156 = vld [vmem:[#allocation2 + $0x338] sm:$0xff]
    %v157 = vld [vmem:[#allocation2 + $0x340] sm:$0xff]
    %v158 = vld [vmem:[#allocation2 + $0x348] sm:$0xff]
    %v159 = vld [vmem:[#allocation2 + $0x350] sm:$0xff]
    %v160 = vld [vmem:[#allocation2 + $0x358] sm:$0xff]
    %v161 = vld [vmem:[#allocation2 + $0x360] sm:$0xff]
    %v162 = vld [vmem:[#allocation2 + $0x368] sm:$0xff]
    %v163 = vld [vmem:[#allocation2 + $0x370] sm:$0xff]
    %v164 = vld [vmem:[#allocation2 + $0x378] sm:$0xff]
    %v165 = vld [vmem:[#allocation2 + $0x380] sm:$0xff]
    %v166 = vld [vmem:[#allocation2 + $0x388] sm:$0xff]
    %v167 = vld [vmem:[#allocation2 + $0x390] sm:$0xff]
    %v168 = vld [vmem:[#allocation2 + $0x398] sm:$0xff]
    %v169 = vld [vmem:[#allocation2 + $0x3a0] sm:$0xff]
    %v170 = vld [vmem:[#allocation2 + $0x3a8] sm:$0xff]
    %v171 = vld [vmem:[#allocation2 + $0x3b0] sm:$0xff]
    %v172 = vld [vmem:[#allocation2 + $0x3b8] sm:$0xff]
    %v173 = vld [vmem:[#allocation2 + $0x3c0] sm:$0xff]
    %v174 = vld [vmem:[#allocation2 + $0x3c8] sm:$0xff]
    %v175 = vld [vmem:[#allocation2 + $0x3d0] sm:$0xff]
    %v176 = vld [vmem:[#allocation2 + $0x3d8] sm:$0xff]
    %v177 = vld [vmem:[#allocation2 + $0x3e0] sm:$0xff]
    %v178 = vld [vmem:[#allocation2 + $0x3e8] sm:$0xff]
    %v179 = vld [vmem:[#allocation2 + $0x3f0] sm:$0xff]
    %v180 = vld [vmem:[#allocation2 + $0x3f8] sm:$0xff]
    %v181 = vld [vmem:[%s2] sm:$0xf]
    %v183 = vlaneseq
    %v184 = vshrl.u32 %v183, 7
    %v185 = vsub.s32 0, %v184
    %v186 = vrot.slane %v181, %v185
    %v187 = vlaneseq
    %v188 = vshrl.u32 %v187, 7
    %v189 = vsub.s32 1, %v188
    %v190 = vrot.slane %v181, %v189
    %v191 = vlaneseq
    %v192 = vshrl.u32 %v191, 7
    %v193 = vsub.s32 2, %v192
    %v194 = vrot.slane %v181, %v193
    %v195 = vlaneseq
    %v196 = vshrl.u32 %v195, 7
    %v197 = vsub.s32 3, %v196
    %v198 = vrot.slane %v181, %v197
    %v207 = vunpack.c.l.b16 %v49
    %v208 = vunpack.c.h.b16 %v49
    %v209 = vunpack.c.l.b16 %v50
    %v210 = vunpack.c.h.b16 %v50
    %v211 = vunpack.c.l.b16 %v51
    %v212 = vunpack.c.h.b16 %v51
    %v213 = vunpack.c.l.b16 %v52
    %v214 = vunpack.c.h.b16 %v52
    %v215 = vpack.c.b16 %v211, %v207
    %v216 = vpack.c.b16 %v212, %v208
    %v217 = vpack.c.b16 %v213, %v209
    %v218 = vpack.c.b16 %v214, %v210
    %v351 = vunpack.c.l.b16 %v53
    %v352 = vunpack.c.h.b16 %v53
    %v353 = vunpack.c.l.b16 %v54
    %v354 = vunpack.c.h.b16 %v54
    %v355 = vunpack.c.l.b16 %v55
    %v356 = vunpack.c.h.b16 %v55
    %v357 = vunpack.c.l.b16 %v56
    %v358 = vunpack.c.h.b16 %v56
    %v359 = vunpack.c.l.b16 %v57
    %v360 = vunpack.c.h.b16 %v57
    %v361 = vunpack.c.l.b16 %v58
    %v362 = vunpack.c.h.b16 %v58
    %v363 = vunpack.c.l.b16 %v59
    %v364 = vunpack.c.h.b16 %v59
    %v365 = vunpack.c.l.b16 %v60
    %v366 = vunpack.c.h.b16 %v60
    %v367 = vunpack.c.l.b16 %v61
    %v368 = vunpack.c.h.b16 %v61
    %v369 = vunpack.c.l.b16 %v62
    %v370 = vunpack.c.h.b16 %v62
    %v371 = vunpack.c.l.b16 %v63
    %v372 = vunpack.c.h.b16 %v63
    %v373 = vunpack.c.l.b16 %v64
    %v374 = vunpack.c.h.b16 %v64
    %v375 = vunpack.c.l.b16 %v65
    %v376 = vunpack.c.h.b16 %v65
    %v377 = vunpack.c.l.b16 %v66
    %v378 = vunpack.c.h.b16 %v66
    %v379 = vunpack.c.l.b16 %v67
    %v380 = vunpack.c.h.b16 %v67
    %v381 = vunpack.c.l.b16 %v68
    %v382 = vunpack.c.h.b16 %v68
    %v383 = vunpack.c.l.b16 %v69
    %v384 = vunpack.c.h.b16 %v69
    %v385 = vunpack.c.l.b16 %v70
    %v386 = vunpack.c.h.b16 %v70
    %v387 = vunpack.c.l.b16 %v71
    %v388 = vunpack.c.h.b16 %v71
    %v389 = vunpack.c.l.b16 %v72
    %v390 = vunpack.c.h.b16 %v72
    %v391 = vunpack.c.l.b16 %v73
    %v392 = vunpack.c.h.b16 %v73
    %v393 = vunpack.c.l.b16 %v74
    %v394 = vunpack.c.h.b16 %v74
    %v395 = vunpack.c.l.b16 %v75
    %v396 = vunpack.c.h.b16 %v75
    %v397 = vunpack.c.l.b16 %v76
    %v398 = vunpack.c.h.b16 %v76
    %v399 = vunpack.c.l.b16 %v77
    %v400 = vunpack.c.h.b16 %v77
    %v401 = vunpack.c.l.b16 %v78
    %v402 = vunpack.c.h.b16 %v78
    %v403 = vunpack.c.l.b16 %v79
    %v404 = vunpack.c.h.b16 %v79
    %v405 = vunpack.c.l.b16 %v80
    %v406 = vunpack.c.h.b16 %v80
    %v407 = vunpack.c.l.b16 %v81
    %v408 = vunpack.c.h.b16 %v81
    %v409 = vunpack.c.l.b16 %v82
    %v410 = vunpack.c.h.b16 %v82
    %v411 = vunpack.c.l.b16 %v83
    %v412 = vunpack.c.h.b16 %v83
    %v413 = vunpack.c.l.b16 %v84
    %v414 = vunpack.c.h.b16 %v84
    %v415 = vunpack.c.l.b16 %v85
    %v416 = vunpack.c.h.b16 %v85
    %v417 = vunpack.c.l.b16 %v86
    %v418 = vunpack.c.h.b16 %v86
    %v419 = vunpack.c.l.b16 %v87
    %v420 = vunpack.c.h.b16 %v87
    %v421 = vunpack.c.l.b16 %v88
    %v422 = vunpack.c.h.b16 %v88
    %v423 = vunpack.c.l.b16 %v89
    %v424 = vunpack.c.h.b16 %v89
    %v425 = vunpack.c.l.b16 %v90
    %v426 = vunpack.c.h.b16 %v90
    %v427 = vunpack.c.l.b16 %v91
    %v428 = vunpack.c.h.b16 %v91
    %v429 = vunpack.c.l.b16 %v92
    %v430 = vunpack.c.h.b16 %v92
    %v431 = vunpack.c.l.b16 %v93
    %v432 = vunpack.c.h.b16 %v93
    %v433 = vunpack.c.l.b16 %v94
    %v434 = vunpack.c.h.b16 %v94
    %v435 = vunpack.c.l.b16 %v95
    %v436 = vunpack.c.h.b16 %v95
    %v437 = vunpack.c.l.b16 %v96
    %v438 = vunpack.c.h.b16 %v96
    %v439 = vunpack.c.l.b16 %v97
    %v440 = vunpack.c.h.b16 %v97
    %v441 = vunpack.c.l.b16 %v98
    %v442 = vunpack.c.h.b16 %v98
    %v443 = vunpack.c.l.b16 %v99
    %v444 = vunpack.c.h.b16 %v99
    %v445 = vunpack.c.l.b16 %v100
    %v446 = vunpack.c.h.b16 %v100
    %v447 = vunpack.c.l.b16 %v101
    %v448 = vunpack.c.h.b16 %v101
    %v449 = vunpack.c.l.b16 %v102
    %v450 = vunpack.c.h.b16 %v102
    %v451 = vunpack.c.l.b16 %v103
    %v452 = vunpack.c.h.b16 %v103
    %v453 = vunpack.c.l.b16 %v104
    %v454 = vunpack.c.h.b16 %v104
    %v455 = vunpack.c.l.b16 %v105
    %v456 = vunpack.c.h.b16 %v105
    %v457 = vunpack.c.l.b16 %v106
    %v458 = vunpack.c.h.b16 %v106
    %v459 = vunpack.c.l.b16 %v107
    %v460 = vunpack.c.h.b16 %v107
    %v461 = vunpack.c.l.b16 %v108
    %v462 = vunpack.c.h.b16 %v108
    %v463 = vunpack.c.l.b16 %v109
    %v464 = vunpack.c.h.b16 %v109
    %v465 = vunpack.c.l.b16 %v110
    %v466 = vunpack.c.h.b16 %v110
    %v467 = vunpack.c.l.b16 %v111
    %v468 = vunpack.c.h.b16 %v111
    %v469 = vunpack.c.l.b16 %v112
    %v470 = vunpack.c.h.b16 %v112
    %v471 = vunpack.c.l.b16 %v113
    %v472 = vunpack.c.h.b16 %v113
    %v473 = vunpack.c.l.b16 %v114
    %v474 = vunpack.c.h.b16 %v114
    %v475 = vunpack.c.l.b16 %v115
    %v476 = vunpack.c.h.b16 %v115
    %v477 = vunpack.c.l.b16 %v116
    %v478 = vunpack.c.h.b16 %v116
    %v479 = vunpack.c.l.b16 %v117
    %v480 = vunpack.c.h.b16 %v117
    %v481 = vunpack.c.l.b16 %v118
    %v482 = vunpack.c.h.b16 %v118
    %v483 = vunpack.c.l.b16 %v119
    %v484 = vunpack.c.h.b16 %v119
    %v485 = vunpack.c.l.b16 %v120
    %v486 = vunpack.c.h.b16 %v120
    %v487 = vunpack.c.l.b16 %v121
    %v488 = vunpack.c.h.b16 %v121
    %v489 = vunpack.c.l.b16 %v122
    %v490 = vunpack.c.h.b16 %v122
    %v491 = vunpack.c.l.b16 %v123
    %v492 = vunpack.c.h.b16 %v123
    %v493 = vunpack.c.l.b16 %v124
    %v494 = vunpack.c.h.b16 %v124
    %v495 = vunpack.c.l.b16 %v125
    %v496 = vunpack.c.h.b16 %v125
    %v497 = vunpack.c.l.b16 %v126
    %v498 = vunpack.c.h.b16 %v126
    %v499 = vunpack.c.l.b16 %v127
    %v500 = vunpack.c.h.b16 %v127
    %v501 = vunpack.c.l.b16 %v128
    %v502 = vunpack.c.h.b16 %v128
    %v503 = vunpack.c.l.b16 %v129
    %v504 = vunpack.c.h.b16 %v129
    %v505 = vunpack.c.l.b16 %v130
    %v506 = vunpack.c.h.b16 %v130
    %v507 = vunpack.c.l.b16 %v131
    %v508 = vunpack.c.h.b16 %v131
    %v509 = vunpack.c.l.b16 %v132
    %v510 = vunpack.c.h.b16 %v132
    %v511 = vunpack.c.l.b16 %v133
    %v512 = vunpack.c.h.b16 %v133
    %v513 = vunpack.c.l.b16 %v134
    %v514 = vunpack.c.h.b16 %v134
    %v515 = vunpack.c.l.b16 %v135
    %v516 = vunpack.c.h.b16 %v135
    %v517 = vunpack.c.l.b16 %v136
    %v518 = vunpack.c.h.b16 %v136
    %v519 = vunpack.c.l.b16 %v137
    %v520 = vunpack.c.h.b16 %v137
    %v521 = vunpack.c.l.b16 %v138
    %v522 = vunpack.c.h.b16 %v138
    %v523 = vunpack.c.l.b16 %v139
    %v524 = vunpack.c.h.b16 %v139
    %v525 = vunpack.c.l.b16 %v140
    %v526 = vunpack.c.h.b16 %v140
    %v527 = vunpack.c.l.b16 %v141
    %v528 = vunpack.c.h.b16 %v141
    %v529 = vunpack.c.l.b16 %v142
    %v530 = vunpack.c.h.b16 %v142
    %v531 = vunpack.c.l.b16 %v143
    %v532 = vunpack.c.h.b16 %v143
    %v533 = vunpack.c.l.b16 %v144
    %v534 = vunpack.c.h.b16 %v144
    %v535 = vunpack.c.l.b16 %v145
    %v536 = vunpack.c.h.b16 %v145
    %v537 = vunpack.c.l.b16 %v146
    %v538 = vunpack.c.h.b16 %v146
    %v539 = vunpack.c.l.b16 %v147
    %v540 = vunpack.c.h.b16 %v147
    %v541 = vunpack.c.l.b16 %v148
    %v542 = vunpack.c.h.b16 %v148
    %v543 = vunpack.c.l.b16 %v149
    %v544 = vunpack.c.h.b16 %v149
    %v545 = vunpack.c.l.b16 %v150
    %v546 = vunpack.c.h.b16 %v150
    %v547 = vunpack.c.l.b16 %v151
    %v548 = vunpack.c.h.b16 %v151
    %v549 = vunpack.c.l.b16 %v152
    %v550 = vunpack.c.h.b16 %v152
    %v551 = vunpack.c.l.b16 %v153
    %v552 = vunpack.c.h.b16 %v153
    %v553 = vunpack.c.l.b16 %v154
    %v554 = vunpack.c.h.b16 %v154
    %v555 = vunpack.c.l.b16 %v155
    %v556 = vunpack.c.h.b16 %v155
    %v557 = vunpack.c.l.b16 %v156
    %v558 = vunpack.c.h.b16 %v156
    %v559 = vunpack.c.l.b16 %v157
    %v560 = vunpack.c.h.b16 %v157
    %v561 = vunpack.c.l.b16 %v158
    %v562 = vunpack.c.h.b16 %v158
    %v563 = vunpack.c.l.b16 %v159
    %v564 = vunpack.c.h.b16 %v159
    %v565 = vunpack.c.l.b16 %v160
    %v566 = vunpack.c.h.b16 %v160
    %v567 = vunpack.c.l.b16 %v161
    %v568 = vunpack.c.h.b16 %v161
    %v569 = vunpack.c.l.b16 %v162
    %v570 = vunpack.c.h.b16 %v162
    %v571 = vunpack.c.l.b16 %v163
    %v572 = vunpack.c.h.b16 %v163
    %v573 = vunpack.c.l.b16 %v164
    %v574 = vunpack.c.h.b16 %v164
    %v575 = vunpack.c.l.b16 %v165
    %v576 = vunpack.c.h.b16 %v165
    %v577 = vunpack.c.l.b16 %v166
    %v578 = vunpack.c.h.b16 %v166
    %v579 = vunpack.c.l.b16 %v167
    %v580 = vunpack.c.h.b16 %v167
    %v581 = vunpack.c.l.b16 %v168
    %v582 = vunpack.c.h.b16 %v168
    %v583 = vunpack.c.l.b16 %v169
    %v584 = vunpack.c.h.b16 %v169
    %v585 = vunpack.c.l.b16 %v170
    %v586 = vunpack.c.h.b16 %v170
    %v587 = vunpack.c.l.b16 %v171
    %v588 = vunpack.c.h.b16 %v171
    %v589 = vunpack.c.l.b16 %v172
    %v590 = vunpack.c.h.b16 %v172
    %v591 = vunpack.c.l.b16 %v173
    %v592 = vunpack.c.h.b16 %v173
    %v593 = vunpack.c.l.b16 %v174
    %v594 = vunpack.c.h.b16 %v174
    %v595 = vunpack.c.l.b16 %v175
    %v596 = vunpack.c.h.b16 %v175
    %v597 = vunpack.c.l.b16 %v176
    %v598 = vunpack.c.h.b16 %v176
    %v599 = vunpack.c.l.b16 %v177
    %v600 = vunpack.c.h.b16 %v177
    %v601 = vunpack.c.l.b16 %v178
    %v602 = vunpack.c.h.b16 %v178
    %v603 = vunpack.c.l.b16 %v179
    %v604 = vunpack.c.h.b16 %v179
    %v605 = vunpack.c.l.b16 %v180
    %v606 = vunpack.c.h.b16 %v180
    %v607 = vpack.c.b16 %v355, %v351
    %v608 = vpack.c.b16 %v356, %v352
    %v609 = vpack.c.b16 %v357, %v353
    %v610 = vpack.c.b16 %v358, %v354
    %v611 = vpack.c.b16 %v363, %v359
    %v612 = vpack.c.b16 %v364, %v360
    %v613 = vpack.c.b16 %v365, %v361
    %v614 = vpack.c.b16 %v366, %v362
    %v615 = vpack.c.b16 %v371, %v367
    %v616 = vpack.c.b16 %v372, %v368
    %v617 = vpack.c.b16 %v373, %v369
    %v618 = vpack.c.b16 %v374, %v370
    %v619 = vpack.c.b16 %v379, %v375
    %v620 = vpack.c.b16 %v380, %v376
    %v621 = vpack.c.b16 %v381, %v377
    %v622 = vpack.c.b16 %v382, %v378
    %v623 = vpack.c.b16 %v387, %v383
    %v624 = vpack.c.b16 %v388, %v384
    %v625 = vpack.c.b16 %v389, %v385
    %v626 = vpack.c.b16 %v390, %v386
    %v627 = vpack.c.b16 %v395, %v391
    %v628 = vpack.c.b16 %v396, %v392
    %v629 = vpack.c.b16 %v397, %v393
    %v630 = vpack.c.b16 %v398, %v394
    %v631 = vpack.c.b16 %v403, %v399
    %v632 = vpack.c.b16 %v404, %v400
    %v633 = vpack.c.b16 %v405, %v401
    %v634 = vpack.c.b16 %v406, %v402
    %v635 = vpack.c.b16 %v411, %v407
    %v636 = vpack.c.b16 %v412, %v408
    %v637 = vpack.c.b16 %v413, %v409
    %v638 = vpack.c.b16 %v414, %v410
    %v639 = vpack.c.b16 %v419, %v415
    %v640 = vpack.c.b16 %v420, %v416
    %v641 = vpack.c.b16 %v421, %v417
    %v642 = vpack.c.b16 %v422, %v418
    %v643 = vpack.c.b16 %v427, %v423
    %v644 = vpack.c.b16 %v428, %v424
    %v645 = vpack.c.b16 %v429, %v425
    %v646 = vpack.c.b16 %v430, %v426
    %v647 = vpack.c.b16 %v435, %v431
    %v648 = vpack.c.b16 %v436, %v432
    %v649 = vpack.c.b16 %v437, %v433
    %v650 = vpack.c.b16 %v438, %v434
    %v651 = vpack.c.b16 %v443, %v439
    %v652 = vpack.c.b16 %v444, %v440
    %v653 = vpack.c.b16 %v445, %v441
    %v654 = vpack.c.b16 %v446, %v442
    %v655 = vpack.c.b16 %v451, %v447
    %v656 = vpack.c.b16 %v452, %v448
    %v657 = vpack.c.b16 %v453, %v449
    %v658 = vpack.c.b16 %v454, %v450
    %v659 = vpack.c.b16 %v459, %v455
    %v660 = vpack.c.b16 %v460, %v456
    %v661 = vpack.c.b16 %v461, %v457
    %v662 = vpack.c.b16 %v462, %v458
    %v663 = vpack.c.b16 %v467, %v463
    %v664 = vpack.c.b16 %v468, %v464
    %v665 = vpack.c.b16 %v469, %v465
    %v666 = vpack.c.b16 %v470, %v466
    %v667 = vpack.c.b16 %v475, %v471
    %v668 = vpack.c.b16 %v476, %v472
    %v669 = vpack.c.b16 %v477, %v473
    %v670 = vpack.c.b16 %v478, %v474
    %v671 = vpack.c.b16 %v483, %v479
    %v672 = vpack.c.b16 %v484, %v480
    %v673 = vpack.c.b16 %v485, %v481
    %v674 = vpack.c.b16 %v486, %v482
    %v675 = vpack.c.b16 %v491, %v487
    %v676 = vpack.c.b16 %v492, %v488
    %v677 = vpack.c.b16 %v493, %v489
    %v678 = vpack.c.b16 %v494, %v490
    %v679 = vpack.c.b16 %v499, %v495
    %v680 = vpack.c.b16 %v500, %v496
    %v681 = vpack.c.b16 %v501, %v497
    %v682 = vpack.c.b16 %v502, %v498
    %v683 = vpack.c.b16 %v507, %v503
    %v684 = vpack.c.b16 %v508, %v504
    %v685 = vpack.c.b16 %v509, %v505
    %v686 = vpack.c.b16 %v510, %v506
    %v687 = vpack.c.b16 %v515, %v511
    %v688 = vpack.c.b16 %v516, %v512
    %v689 = vpack.c.b16 %v517, %v513
    %v690 = vpack.c.b16 %v518, %v514
    %v691 = vpack.c.b16 %v523, %v519
    %v692 = vpack.c.b16 %v524, %v520
    %v693 = vpack.c.b16 %v525, %v521
    %v694 = vpack.c.b16 %v526, %v522
    %v695 = vpack.c.b16 %v531, %v527
    %v696 = vpack.c.b16 %v532, %v528
    %v697 = vpack.c.b16 %v533, %v529
    %v698 = vpack.c.b16 %v534, %v530
    %v699 = vpack.c.b16 %v539, %v535
    %v700 = vpack.c.b16 %v540, %v536
    %v701 = vpack.c.b16 %v541, %v537
    %v702 = vpack.c.b16 %v542, %v538
    %v703 = vpack.c.b16 %v547, %v543
    %v704 = vpack.c.b16 %v548, %v544
    %v705 = vpack.c.b16 %v549, %v545
    %v706 = vpack.c.b16 %v550, %v546
    %v707 = vpack.c.b16 %v555, %v551
    %v708 = vpack.c.b16 %v556, %v552
    %v709 = vpack.c.b16 %v557, %v553
    %v710 = vpack.c.b16 %v558, %v554
    %v711 = vpack.c.b16 %v563, %v559
    %v712 = vpack.c.b16 %v564, %v560
    %v713 = vpack.c.b16 %v565, %v561
    %v714 = vpack.c.b16 %v566, %v562
    %v715 = vpack.c.b16 %v571, %v567
    %v716 = vpack.c.b16 %v572, %v568
    %v717 = vpack.c.b16 %v573, %v569
    %v718 = vpack.c.b16 %v574, %v570
    %v719 = vpack.c.b16 %v579, %v575
    %v720 = vpack.c.b16 %v580, %v576
    %v721 = vpack.c.b16 %v581, %v577
    %v722 = vpack.c.b16 %v582, %v578
    %v723 = vpack.c.b16 %v587, %v583
    %v724 = vpack.c.b16 %v588, %v584
    %v725 = vpack.c.b16 %v589, %v585
    %v726 = vpack.c.b16 %v590, %v586
    %v727 = vpack.c.b16 %v595, %v591
    %v728 = vpack.c.b16 %v596, %v592
    %v729 = vpack.c.b16 %v597, %v593
    %v730 = vpack.c.b16 %v598, %v594
    %v731 = vpack.c.b16 %v603, %v599
    %v732 = vpack.c.b16 %v604, %v600
    %v733 = vpack.c.b16 %v605, %v601
    %v734 = vpack.c.b16 %v606, %v602
    %863 = vmatprep.subr.bf16.mxu0 %v636
    %864 = vmatpush1.bf16.msra.mxu0 %v635
    %865 = vmatprep.subr.bf16.mxu0 %v632
    %866 = vmatpush1.bf16.msra.mxu0 %v631
    %867 = vmatprep.subr.bf16.mxu0 %v628
    %868 = vmatpush1.bf16.msra.mxu0 %v627
    %869 = vmatprep.subr.bf16.mxu0 %v624
    %870 = vmatpush1.bf16.msra.mxu0 %v623
    %871 = vmatprep.subr.bf16.mxu0 %v620
    %872 = vmatpush1.bf16.msra.mxu0 %v619
    %873 = vmatprep.subr.bf16.mxu0 %v616
    %874 = vmatpush1.bf16.msra.mxu0 %v615
    %875 = vmatprep.subr.bf16.mxu0 %v612
    %876 = vmatpush1.bf16.msra.mxu0 %v611
    %877 = vmatprep.subr.bf16.mxu0 %v608
    %878 = vmatpush1.bf16.msra.mxu0 %v607
    %879 = vmatprep.subr.bf16.mxu0 %v668
    %880 = vmatpush2.bf16.msra.mxu0 %v667
    %881 = vmatprep.subr.bf16.mxu0 %v664
    %882 = vmatpush2.bf16.msra.mxu0 %v663
    %883 = vmatprep.subr.bf16.mxu0 %v660
    %884 = vmatpush2.bf16.msra.mxu0 %v659
    %885 = vmatprep.subr.bf16.mxu0 %v656
    %886 = vmatpush2.bf16.msra.mxu0 %v655
    %887 = vmatprep.subr.bf16.mxu0 %v652
    %888 = vmatpush2.bf16.msra.mxu0 %v651
    %889 = vmatprep.subr.bf16.mxu0 %v648
    %890 = vmatpush2.bf16.msra.mxu0 %v647
    %891 = vmatprep.subr.bf16.mxu0 %v644
    %892 = vmatpush2.bf16.msra.mxu0 %v643
    %893 = vmatprep.subr.bf16.mxu0 %v640
    %894 = vmatpush2.bf16.msra.mxu0 %v639
    %895 = vmatprep.mubr.bf16.mxu0 %v216
    %896 = vmatmul.mubr.bf16.gmra.mxu0 %v215
    %v897 = vpop.f32.mrf.mxu0
    %v898 = vadd.f32 %v186, %v897
    %v899 = vpop.f32.mrf.mxu0
    %v900 = vadd.f32 %v190, %v899
    %v901 = vpop.f32.mrf.mxu0
    %v902 = vadd.f32 %v186, %v901
    %v903 = vpop.f32.mrf.mxu0
    %v904 = vadd.f32 %v190, %v903
    %905 = vdwg.mxu0
    %906 = vmatprep.subr.bf16.mxu0 %v700
    %907 = vmatpush1.bf16.msra.mxu0 %v699
    %908 = vmatprep.subr.bf16.mxu0 %v696
    %909 = vmatpush1.bf16.msra.mxu0 %v695
    %910 = vmatprep.subr.bf16.mxu0 %v692
    %911 = vmatpush1.bf16.msra.mxu0 %v691
    %912 = vmatprep.subr.bf16.mxu0 %v688
    %913 = vmatpush1.bf16.msra.mxu0 %v687
    %914 = vmatprep.subr.bf16.mxu0 %v684
    %915 = vmatpush1.bf16.msra.mxu0 %v683
    %916 = vmatprep.subr.bf16.mxu0 %v680
    %917 = vmatpush1.bf16.msra.mxu0 %v679
    %918 = vmatprep.subr.bf16.mxu0 %v676
    %919 = vmatpush1.bf16.msra.mxu0 %v675
    %920 = vmatprep.subr.bf16.mxu0 %v672
    %921 = vmatpush1.bf16.msra.mxu0 %v671
    %922 = vmatprep.subr.bf16.mxu0 %v732
    %923 = vmatpush2.bf16.msra.mxu0 %v731
    %924 = vmatprep.subr.bf16.mxu0 %v728
    %925 = vmatpush2.bf16.msra.mxu0 %v727
    %926 = vmatprep.subr.bf16.mxu0 %v724
    %927 = vmatpush2.bf16.msra.mxu0 %v723
    %928 = vmatprep.subr.bf16.mxu0 %v720
    %929 = vmatpush2.bf16.msra.mxu0 %v719
    %930 = vmatprep.subr.bf16.mxu0 %v716
    %931 = vmatpush2.bf16.msra.mxu0 %v715
    %932 = vmatprep.subr.bf16.mxu0 %v712
    %933 = vmatpush2.bf16.msra.mxu0 %v711
    %934 = vmatprep.subr.bf16.mxu0 %v708
    %935 = vmatpush2.bf16.msra.mxu0 %v707
    %936 = vmatprep.subr.bf16.mxu0 %v704
    %937 = vmatpush2.bf16.msra.mxu0 %v703
    %938 = vmatprep.mubr.bf16.mxu0 %v218
    %939 = vmatmul.mubr.bf16.gmra.mxu0 %v217
    %v940 = vpop.f32.mrf.mxu0
    %v941 = vadd.f32 %v898, %v940
    %v942 = vpop.f32.mrf.mxu0
    %v943 = vadd.f32 %v900, %v942
    %v944 = vpop.f32.mrf.mxu0
    %v945 = vadd.f32 %v902, %v944
    %v946 = vpop.f32.mrf.mxu0
    %v947 = vadd.f32 %v904, %v946
    %948 = vdwg.mxu0
    %949 = vmatprep.subr.bf16.mxu0 %v638
    %950 = vmatpush1.bf16.msra.mxu0 %v637
    %951 = vmatprep.subr.bf16.mxu0 %v634
    %952 = vmatpush1.bf16.msra.mxu0 %v633
    %953 = vmatprep.subr.bf16.mxu0 %v630
    %954 = vmatpush1.bf16.msra.mxu0 %v629
    %955 = vmatprep.subr.bf16.mxu0 %v626
    %956 = vmatpush1.bf16.msra.mxu0 %v625
    %957 = vmatprep.subr.bf16.mxu0 %v622
    %958 = vmatpush1.bf16.msra.mxu0 %v621
    %959 = vmatprep.subr.bf16.mxu0 %v618
    %960 = vmatpush1.bf16.msra.mxu0 %v617
    %961 = vmatprep.subr.bf16.mxu0 %v614
    %962 = vmatpush1.bf16.msra.mxu0 %v613
    %963 = vmatprep.subr.bf16.mxu0 %v610
    %964 = vmatpush1.bf16.msra.mxu0 %v609
    %965 = vmatprep.subr.bf16.mxu0 %v670
    %966 = vmatpush2.bf16.msra.mxu0 %v669
    %967 = vmatprep.subr.bf16.mxu0 %v666
    %968 = vmatpush2.bf16.msra.mxu0 %v665
    %969 = vmatprep.subr.bf16.mxu0 %v662
    %970 = vmatpush2.bf16.msra.mxu0 %v661
    %971 = vmatprep.subr.bf16.mxu0 %v658
    %972 = vmatpush2.bf16.msra.mxu0 %v657
    %973 = vmatprep.subr.bf16.mxu0 %v654
    %974 = vmatpush2.bf16.msra.mxu0 %v653
    %975 = vmatprep.subr.bf16.mxu0 %v650
    %976 = vmatpush2.bf16.msra.mxu0 %v649
    %977 = vmatprep.subr.bf16.mxu0 %v646
    %978 = vmatpush2.bf16.msra.mxu0 %v645
    %979 = vmatprep.subr.bf16.mxu0 %v642
    %980 = vmatpush2.bf16.msra.mxu0 %v641
    %981 = vmatprep.mubr.bf16.mxu0 %v216
    %982 = vmatmul.mubr.bf16.gmra.mxu0 %v215
    %v983 = vpop.f32.mrf.mxu0
    %v984 = vadd.f32 %v194, %v983
    %v985 = vpop.f32.mrf.mxu0
    %v986 = vadd.f32 %v198, %v985
    %v987 = vpop.f32.mrf.mxu0
    %v988 = vadd.f32 %v194, %v987
    %v989 = vpop.f32.mrf.mxu0
    %v990 = vadd.f32 %v198, %v989
    %991 = vdwg.mxu0
    %992 = vmatprep.subr.bf16.mxu0 %v702
    %993 = vmatpush1.bf16.msra.mxu0 %v701
    %994 = vmatprep.subr.bf16.mxu0 %v698
    %995 = vmatpush1.bf16.msra.mxu0 %v697
    %996 = vmatprep.subr.bf16.mxu0 %v694
    %997 = vmatpush1.bf16.msra.mxu0 %v693
    %998 = vmatprep.subr.bf16.mxu0 %v690
    %999 = vmatpush1.bf16.msra.mxu0 %v689
    %1000 = vmatprep.subr.bf16.mxu0 %v686
    %1001 = vmatpush1.bf16.msra.mxu0 %v685
    %1002 = vmatprep.subr.bf16.mxu0 %v682
    %1003 = vmatpush1.bf16.msra.mxu0 %v681
    %1004 = vmatprep.subr.bf16.mxu0 %v678
    %1005 = vmatpush1.bf16.msra.mxu0 %v677
    %1006 = vmatprep.subr.bf16.mxu0 %v674
    %1007 = vmatpush1.bf16.msra.mxu0 %v673
    %1008 = vmatprep.subr.bf16.mxu0 %v734
    %1009 = vmatpush2.bf16.msra.mxu0 %v733
    %1010 = vmatprep.subr.bf16.mxu0 %v730
    %1011 = vmatpush2.bf16.msra.mxu0 %v729
    %1012 = vmatprep.subr.bf16.mxu0 %v726
    %1013 = vmatpush2.bf16.msra.mxu0 %v725
    %1014 = vmatprep.subr.bf16.mxu0 %v722
    %1015 = vmatpush2.bf16.msra.mxu0 %v721
    %1016 = vmatprep.subr.bf16.mxu0 %v718
    %1017 = vmatpush2.bf16.msra.mxu0 %v717
    %1018 = vmatprep.subr.bf16.mxu0 %v714
    %1019 = vmatpush2.bf16.msra.mxu0 %v713
    %1020 = vmatprep.subr.bf16.mxu0 %v710
    %1021 = vmatpush2.bf16.msra.mxu0 %v709
    %1022 = vmatprep.subr.bf16.mxu0 %v706
    %1023 = vmatpush2.bf16.msra.mxu0 %v705
    %1024 = vmatprep.mubr.bf16.mxu0 %v218
    %1025 = vmatmul.mubr.bf16.gmra.mxu0 %v217
    %v1026 = vpop.f32.mrf.mxu0
    %v1027 = vadd.f32 %v984, %v1026
    %v1028 = vpop.f32.mrf.mxu0
    %v1029 = vadd.f32 %v986, %v1028
    %v1030 = vpop.f32.mrf.mxu0
    %v1031 = vadd.f32 %v988, %v1030
    %v1032 = vpop.f32.mrf.mxu0
    %v1033 = vadd.f32 %v990, %v1032
    %1034 = vdwg.mxu0
    %v1035 = vmax.f32 %v941, 0.0
    %v1036 = vmax.f32 %v943, 0.0
    %v1037 = vmax.f32 %v1027, 0.0
    %v1038 = vmax.f32 %v1029, 0.0
    %v1039 = vmax.f32 %v945, 0.0
    %v1040 = vmax.f32 %v947, 0.0
    %v1041 = vmax.f32 %v1031, 0.0
    %v1042 = vmax.f32 %v1033, 0.0
    %v1043 = vpack.c.bf16 %v1039, %v1035
    %v1044 = vpack.c.bf16 %v1040, %v1036
    %v1045 = vpack.c.bf16 %v1041, %v1037
    %v1046 = vpack.c.bf16 %v1042, %v1038
    %v1047 = vld [vmem:[#allocation4] sm:$0xf]
    %v1048 = vld [vmem:[#allocation4 + $0x4] sm:$0xf]
    %v1049 = vld [vmem:[#allocation4 + $0x8] sm:$0xf]
    %v1050 = vld [vmem:[#allocation4 + $0xc] sm:$0xf]
    %v1051 = vld [vmem:[#allocation4 + $0x10] sm:$0xf]
    %v1052 = vld [vmem:[#allocation4 + $0x14] sm:$0xf]
    %v1053 = vld [vmem:[#allocation4 + $0x18] sm:$0xf]
    %v1054 = vld [vmem:[#allocation4 + $0x1c] sm:$0xf]
    %v1055 = vld [vmem:[#allocation4 + $0x20] sm:$0xf]
    %v1056 = vld [vmem:[#allocation4 + $0x24] sm:$0xf]
    %v1057 = vld [vmem:[#allocation4 + $0x28] sm:$0xf]
    %v1058 = vld [vmem:[#allocation4 + $0x2c] sm:$0xf]
    %v1059 = vld [vmem:[#allocation4 + $0x30] sm:$0xf]
    %v1060 = vld [vmem:[#allocation4 + $0x34] sm:$0xf]
    %v1061 = vld [vmem:[#allocation4 + $0x38] sm:$0xf]
    %v1062 = vld [vmem:[#allocation4 + $0x3c] sm:$0xf]
    %v1063 = vld [vmem:[#allocation4 + $0x40] sm:$0xf]
    %v1064 = vld [vmem:[#allocation4 + $0x44] sm:$0xf]
    %v1065 = vld [vmem:[#allocation4 + $0x48] sm:$0xf]
    %v1066 = vld [vmem:[#allocation4 + $0x4c] sm:$0xf]
    %v1067 = vld [vmem:[#allocation4 + $0x50] sm:$0xf]
    %v1068 = vld [vmem:[#allocation4 + $0x54] sm:$0xf]
    %v1069 = vld [vmem:[#allocation4 + $0x58] sm:$0xf]
    %v1070 = vld [vmem:[#allocation4 + $0x5c] sm:$0xf]
    %v1071 = vld [vmem:[#allocation4 + $0x60] sm:$0xf]
    %v1072 = vld [vmem:[#allocation4 + $0x64] sm:$0xf]
    %v1073 = vld [vmem:[#allocation4 + $0x68] sm:$0xf]
    %v1074 = vld [vmem:[#allocation4 + $0x6c] sm:$0xf]
    %v1075 = vld [vmem:[#allocation4 + $0x70] sm:$0xf]
    %v1076 = vld [vmem:[#allocation4 + $0x74] sm:$0xf]
    %v1077 = vld [vmem:[#allocation4 + $0x78] sm:$0xf]
    %v1078 = vld [vmem:[#allocation4 + $0x7c] sm:$0xf]
    %v1079 = vld [vmem:[#allocation4 + $0x80] sm:$0xf]
    %v1080 = vld [vmem:[#allocation4 + $0x84] sm:$0xf]
    %v1081 = vld [vmem:[#allocation4 + $0x88] sm:$0xf]
    %v1082 = vld [vmem:[#allocation4 + $0x8c] sm:$0xf]
    %v1083 = vld [vmem:[#allocation4 + $0x90] sm:$0xf]
    %v1084 = vld [vmem:[#allocation4 + $0x94] sm:$0xf]
    %v1085 = vld [vmem:[#allocation4 + $0x98] sm:$0xf]
    %v1086 = vld [vmem:[#allocation4 + $0x9c] sm:$0xf]
    %v1087 = vld [vmem:[#allocation4 + $0xa0] sm:$0xf]
    %v1088 = vld [vmem:[#allocation4 + $0xa4] sm:$0xf]
    %v1089 = vld [vmem:[#allocation4 + $0xa8] sm:$0xf]
    %v1090 = vld [vmem:[#allocation4 + $0xac] sm:$0xf]
    %v1091 = vld [vmem:[#allocation4 + $0xb0] sm:$0xf]
    %v1092 = vld [vmem:[#allocation4 + $0xb4] sm:$0xf]
    %v1093 = vld [vmem:[#allocation4 + $0xb8] sm:$0xf]
    %v1094 = vld [vmem:[#allocation4 + $0xbc] sm:$0xf]
    %v1095 = vld [vmem:[#allocation4 + $0xc0] sm:$0xf]
    %v1096 = vld [vmem:[#allocation4 + $0xc4] sm:$0xf]
    %v1097 = vld [vmem:[#allocation4 + $0xc8] sm:$0xf]
    %v1098 = vld [vmem:[#allocation4 + $0xcc] sm:$0xf]
    %v1099 = vld [vmem:[#allocation4 + $0xd0] sm:$0xf]
    %v1100 = vld [vmem:[#allocation4 + $0xd4] sm:$0xf]
    %v1101 = vld [vmem:[#allocation4 + $0xd8] sm:$0xf]
    %v1102 = vld [vmem:[#allocation4 + $0xdc] sm:$0xf]
    %v1103 = vld [vmem:[#allocation4 + $0xe0] sm:$0xf]
    %v1104 = vld [vmem:[#allocation4 + $0xe4] sm:$0xf]
    %v1105 = vld [vmem:[#allocation4 + $0xe8] sm:$0xf]
    %v1106 = vld [vmem:[#allocation4 + $0xec] sm:$0xf]
    %v1107 = vld [vmem:[#allocation4 + $0xf0] sm:$0xf]
    %v1108 = vld [vmem:[#allocation4 + $0xf4] sm:$0xf]
    %v1109 = vld [vmem:[#allocation4 + $0xf8] sm:$0xf]
    %v1110 = vld [vmem:[#allocation4 + $0xfc] sm:$0xf]
    %v1111 = vld [vmem:[%s4] sm:$0x1]
    %v1113 = vlaneseq
    %v1114 = vshrl.u32 %v1113, 7
    %v1115 = vsub.s32 0, %v1114
    %v1116 = vrot.slane %v1111, %v1115
    %v1182 = vunpack.c.l.b16 %v1047
    %v1183 = vunpack.c.l.b16 %v1048
    %v1184 = vunpack.c.l.b16 %v1049
    %v1185 = vunpack.c.l.b16 %v1050
    %v1186 = vunpack.c.l.b16 %v1051
    %v1187 = vunpack.c.l.b16 %v1052
    %v1188 = vunpack.c.l.b16 %v1053
    %v1189 = vunpack.c.l.b16 %v1054
    %v1190 = vunpack.c.l.b16 %v1055
    %v1191 = vunpack.c.l.b16 %v1056
    %v1192 = vunpack.c.l.b16 %v1057
    %v1193 = vunpack.c.l.b16 %v1058
    %v1194 = vunpack.c.l.b16 %v1059
    %v1195 = vunpack.c.l.b16 %v1060
    %v1196 = vunpack.c.l.b16 %v1061
    %v1197 = vunpack.c.l.b16 %v1062
    %v1198 = vunpack.c.l.b16 %v1063
    %v1199 = vunpack.c.l.b16 %v1064
    %v1200 = vunpack.c.l.b16 %v1065
    %v1201 = vunpack.c.l.b16 %v1066
    %v1202 = vunpack.c.l.b16 %v1067
    %v1203 = vunpack.c.l.b16 %v1068
    %v1204 = vunpack.c.l.b16 %v1069
    %v1205 = vunpack.c.l.b16 %v1070
    %v1206 = vunpack.c.l.b16 %v1071
    %v1207 = vunpack.c.l.b16 %v1072
    %v1208 = vunpack.c.l.b16 %v1073
    %v1209 = vunpack.c.l.b16 %v1074
    %v1210 = vunpack.c.l.b16 %v1075
    %v1211 = vunpack.c.l.b16 %v1076
    %v1212 = vunpack.c.l.b16 %v1077
    %v1213 = vunpack.c.l.b16 %v1078
    %v1214 = vunpack.c.l.b16 %v1079
    %v1215 = vunpack.c.l.b16 %v1080
    %v1216 = vunpack.c.l.b16 %v1081
    %v1217 = vunpack.c.l.b16 %v1082
    %v1218 = vunpack.c.l.b16 %v1083
    %v1219 = vunpack.c.l.b16 %v1084
    %v1220 = vunpack.c.l.b16 %v1085
    %v1221 = vunpack.c.l.b16 %v1086
    %v1222 = vunpack.c.l.b16 %v1087
    %v1223 = vunpack.c.l.b16 %v1088
    %v1224 = vunpack.c.l.b16 %v1089
    %v1225 = vunpack.c.l.b16 %v1090
    %v1226 = vunpack.c.l.b16 %v1091
    %v1227 = vunpack.c.l.b16 %v1092
    %v1228 = vunpack.c.l.b16 %v1093
    %v1229 = vunpack.c.l.b16 %v1094
    %v1230 = vunpack.c.l.b16 %v1095
    %v1231 = vunpack.c.l.b16 %v1096
    %v1232 = vunpack.c.l.b16 %v1097
    %v1233 = vunpack.c.l.b16 %v1098
    %v1234 = vunpack.c.l.b16 %v1099
    %v1235 = vunpack.c.l.b16 %v1100
    %v1236 = vunpack.c.l.b16 %v1101
    %v1237 = vunpack.c.l.b16 %v1102
    %v1238 = vunpack.c.l.b16 %v1103
    %v1239 = vunpack.c.l.b16 %v1104
    %v1240 = vunpack.c.l.b16 %v1105
    %v1241 = vunpack.c.l.b16 %v1106
    %v1242 = vunpack.c.l.b16 %v1107
    %v1243 = vunpack.c.l.b16 %v1108
    %v1244 = vunpack.c.l.b16 %v1109
    %v1245 = vunpack.c.l.b16 %v1110
    %v1246 = vpack.c.b16 %v1183, %v1182
    %v1247 = vpack.c.b16 %v1185, %v1184
    %v1248 = vpack.c.b16 %v1187, %v1186
    %v1249 = vpack.c.b16 %v1189, %v1188
    %v1250 = vpack.c.b16 %v1191, %v1190
    %v1251 = vpack.c.b16 %v1193, %v1192
    %v1252 = vpack.c.b16 %v1195, %v1194
    %v1253 = vpack.c.b16 %v1197, %v1196
    %v1254 = vpack.c.b16 %v1199, %v1198
    %v1255 = vpack.c.b16 %v1201, %v1200
    %v1256 = vpack.c.b16 %v1203, %v1202
    %v1257 = vpack.c.b16 %v1205, %v1204
    %v1258 = vpack.c.b16 %v1207, %v1206
    %v1259 = vpack.c.b16 %v1209, %v1208
    %v1260 = vpack.c.b16 %v1211, %v1210
    %v1261 = vpack.c.b16 %v1213, %v1212
    %v1262 = vpack.c.b16 %v1215, %v1214
    %v1263 = vpack.c.b16 %v1217, %v1216
    %v1264 = vpack.c.b16 %v1219, %v1218
    %v1265 = vpack.c.b16 %v1221, %v1220
    %v1266 = vpack.c.b16 %v1223, %v1222
    %v1267 = vpack.c.b16 %v1225, %v1224
    %v1268 = vpack.c.b16 %v1227, %v1226
    %v1269 = vpack.c.b16 %v1229, %v1228
    %v1270 = vpack.c.b16 %v1231, %v1230
    %v1271 = vpack.c.b16 %v1233, %v1232
    %v1272 = vpack.c.b16 %v1235, %v1234
    %v1273 = vpack.c.b16 %v1237, %v1236
    %v1274 = vpack.c.b16 %v1239, %v1238
    %v1275 = vpack.c.b16 %v1241, %v1240
    %v1276 = vpack.c.b16 %v1243, %v1242
    %v1277 = vpack.c.b16 %v1245, %v1244
    %1310 = vmatprep.subr.bf16.mxu0 0
    %1311 = vmatpush1.bf16.msra.mxu0 %v1253
    %1312 = vmatprep.subr.bf16.mxu0 0
    %1313 = vmatpush1.bf16.msra.mxu0 %v1252
    %1314 = vmatprep.subr.bf16.mxu0 0
    %1315 = vmatpush1.bf16.msra.mxu0 %v1251
    %1316 = vmatprep.subr.bf16.mxu0 0
    %1317 = vmatpush1.bf16.msra.mxu0 %v1250
    %1318 = vmatprep.subr.bf16.mxu0 0
    %1319 = vmatpush1.bf16.msra.mxu0 %v1249
    %1320 = vmatprep.subr.bf16.mxu0 0
    %1321 = vmatpush1.bf16.msra.mxu0 %v1248
    %1322 = vmatprep.subr.bf16.mxu0 0
    %1323 = vmatpush1.bf16.msra.mxu0 %v1247
    %1324 = vmatprep.subr.bf16.mxu0 0
    %1325 = vmatpush1.bf16.msra.mxu0 %v1246
    %1326 = vmatprep.subr.bf16.mxu0 0
    %1327 = vmatpush2.bf16.msra.mxu0 %v1261
    %1328 = vmatprep.subr.bf16.mxu0 0
    %1329 = vmatpush2.bf16.msra.mxu0 %v1260
    %1330 = vmatprep.subr.bf16.mxu0 0
    %1331 = vmatpush2.bf16.msra.mxu0 %v1259
    %1332 = vmatprep.subr.bf16.mxu0 0
    %1333 = vmatpush2.bf16.msra.mxu0 %v1258
    %1334 = vmatprep.subr.bf16.mxu0 0
    %1335 = vmatpush2.bf16.msra.mxu0 %v1257
    %1336 = vmatprep.subr.bf16.mxu0 0
    %1337 = vmatpush2.bf16.msra.mxu0 %v1256
    %1338 = vmatprep.subr.bf16.mxu0 0
    %1339 = vmatpush2.bf16.msra.mxu0 %v1255
    %1340 = vmatprep.subr.bf16.mxu0 0
    %1341 = vmatpush2.bf16.msra.mxu0 %v1254
    %1342 = vmatprep.mubr.bf16.mxu0 %v1044
    %1343 = vmatmul.mubr.bf16.gmra.mxu0 %v1043
    %v1344 = vpop.f32.mrf.mxu0
    %v1345 = vadd.f32 %v1116, %v1344
    %v1346 = vpop.f32.mrf.mxu0
    %v1347 = vpop.f32.mrf.mxu0
    %v1348 = vadd.f32 %v1116, %v1347
    %v1349 = vpop.f32.mrf.mxu0
    %1350 = vdwg.mxu0
    %1351 = vmatprep.subr.bf16.mxu0 0
    %1352 = vmatpush1.bf16.msra.mxu0 %v1269
    %1353 = vmatprep.subr.bf16.mxu0 0
    %1354 = vmatpush1.bf16.msra.mxu0 %v1268
    %1355 = vmatprep.subr.bf16.mxu0 0
    %1356 = vmatpush1.bf16.msra.mxu0 %v1267
    %1357 = vmatprep.subr.bf16.mxu0 0
    %1358 = vmatpush1.bf16.msra.mxu0 %v1266
    %1359 = vmatprep.subr.bf16.mxu0 0
    %1360 = vmatpush1.bf16.msra.mxu0 %v1265
    %1361 = vmatprep.subr.bf16.mxu0 0
    %1362 = vmatpush1.bf16.msra.mxu0 %v1264
    %1363 = vmatprep.subr.bf16.mxu0 0
    %1364 = vmatpush1.bf16.msra.mxu0 %v1263
    %1365 = vmatprep.subr.bf16.mxu0 0
    %1366 = vmatpush1.bf16.msra.mxu0 %v1262
    %1367 = vmatprep.subr.bf16.mxu0 0
    %1368 = vmatpush2.bf16.msra.mxu0 %v1277
    %1369 = vmatprep.subr.bf16.mxu0 0
    %1370 = vmatpush2.bf16.msra.mxu0 %v1276
    %1371 = vmatprep.subr.bf16.mxu0 0
    %1372 = vmatpush2.bf16.msra.mxu0 %v1275
    %1373 = vmatprep.subr.bf16.mxu0 0
    %1374 = vmatpush2.bf16.msra.mxu0 %v1274
    %1375 = vmatprep.subr.bf16.mxu0 0
    %1376 = vmatpush2.bf16.msra.mxu0 %v1273
    %1377 = vmatprep.subr.bf16.mxu0 0
    %1378 = vmatpush2.bf16.msra.mxu0 %v1272
    %1379 = vmatprep.subr.bf16.mxu0 0
    %1380 = vmatpush2.bf16.msra.mxu0 %v1271
    %1381 = vmatprep.subr.bf16.mxu0 0
    %1382 = vmatpush2.bf16.msra.mxu0 %v1270
    %1383 = vmatprep.mubr.bf16.mxu0 %v1046
    %1384 = vmatmul.mubr.bf16.gmra.mxu0 %v1045
    %v1385 = vpop.f32.mrf.mxu0
    %v1386 = vadd.f32 %v1345, %v1385
    %v1387 = vpop.f32.mrf.mxu0
    %v1388 = vpop.f32.mrf.mxu0
    %v1389 = vadd.f32 %v1348, %v1388
    %v1390 = vpop.f32.mrf.mxu0
    %1391 = vdwg.mxu0
    %v1392 = vmul.f32 %v1386, %v1386
    %v1393 = vmul.f32 %v1389, %v1389
    %1394 = vadd.xlane.f32.xlu0 %v1392
    %v1395 = vpop.xlane.xlu0 %1394
    %1396 = vadd.xlane.f32.xlu0 %v1393
    %v1397 = vpop.xlane.xlu0 %1396
    %v1398 = vmax.f32 %v1395, 1e-24
    %v1399 = vmax.f32 %v1397, 1e-24
    %v1400 = vrsqrt.pop %v1398
    %v1401 = vrsqrt.pop %v1399
    %v1402 = vmul.f32 %v1386, %v1400
    %v1403 = vmul.f32 %v1389, %v1401
    %1404 = vst [vmem:[%s5] sm:$0xff] %v1402
    %1405 = vst [vmem:[%s5 + $0x8] sm:$0xff] %v1403
    // Predicated region
    $region30: #{_run_mlp_rows.1} parent=1 // pred_check
      _
    $region31: #{_run_mlp_rows.1} parent=1 // pred_check_branch
      %1407 = sbr.rel (0) target = $region33
    $region32: #{_run_mlp_rows.1} parent=1 // pred_region
      _
    $region33: #{_run_mlp_rows.1} parent=1 // pred_fallthru
      _
    // Predicated region
    $region34: #{_run_mlp_rows.1} parent=1 // pred_check
      _
    $region35: #{_run_mlp_rows.1} parent=1 // pred_check_branch
      %1409 = sbr.rel (0) target = $region37
    $region36: #{_run_mlp_rows.1} parent=1 // pred_region
      _
    $region37: #{_run_mlp_rows.1} parent=1 // pred_fallthru
      _
    %1410 = vsyncpa [#allocation3], 1
    %1411 = vsyncpa [#allocation5], 1

</llo_original>
